<compile_context>
chip_gen: v5e
topology: v5e:2x2
jax: 0.10.0
libtpu: 0.0.40
codegen_flags: <defaults>
</compile_context>

<pallas_src>
import math
import numpy as np
import jax
import jax.numpy as jnp
from jax.experimental import pallas as pl
from jax.experimental.pallas import tpu as pltpu

EPS = 1e-5
KH = KW = 9            # log-polar pooling window
PAD = 4                # (KH - 1) // 2, stride 1
CENTER = 4
NUM_LEVELS = 2
ANG_LEVELS = 6
FACBASE = 2
LANE = 128             # TPU lane width


def _cdiv(a, b):
    return (a + b - 1) // b


def _round_up(a, b):
    return _cdiv(a, b) * b


# --------------------------- fused Pallas kernel -------------------------------
def _matmul_bias_relu_kernel(x_ref, w_ref, s_ref, o_ref):
    # One K-packed MXU dot per M-tile (K = 81*cin), f32 accumulation, then
    # folded BN/bias shift + ReLU, stored exactly once (lane-dense cpad).
    acc = jnp.dot(x_ref[...], w_ref[...], preferred_element_type=jnp.float32)
    o_ref[...] = jnp.maximum(acc + s_ref[...], 0.0).astype(o_ref.dtype)


def _pick_tm(m, k, cpad, in_itemsize):
    """Largest M-tile that fits a v7x-safe VMEM budget and still populates the
    parallel grid axis (>= 4 steps when possible)."""
    budget = 16 * 1024 * 1024          # double-buffered tiles + resident weight
    tm = 512
    while tm > 8:
        need = (2 * tm * k * in_itemsize          # double-buffered LHS tile
                + k * cpad * in_itemsize          # resident folded weight
                + 2 * tm * cpad * 4               # double-buffered f32 output tile
                + cpad * 4)                       # shift
        if need <= budget and _cdiv(m, tm) >= min(4, _cdiv(m, 8)):
            break
        tm //= 2
    return max(8, min(tm, _round_up(m, 8)))


def fused_conv_bn_res_relu(cols, wcol, shift, *, m, tm, k, cpad, planes):
    """relu( cols @ wcol + shift ) as one pallas_call tiled over M rows.

    cols:  (Mpad, K)   bf16/f32 im2col of the padded input (K = 81*cin)
    wcol:  (K, cpad)   folded weight (logpl1+conv1+centerconv1+BN scale+residual)
    shift: (1, cpad)   folded per-channel shift (BN shift + centerconv bias)
    returns (Mpad, cpad) float32
    """
    mpad = cols.shape[0]
    grid = (mpad // tm,)

    flops = 2 * m * k * planes                      # use real planes, not cpad
    bytes_accessed = (cols.size * cols.dtype.itemsize
                      + wcol.size * wcol.dtype.itemsize      # weight read once
                      + shift.size * shift.dtype.itemsize
                      + mpad * cpad * 4)

    return pl.pallas_call(
        _matmul_bias_relu_kernel,
        out_shape=jax.ShapeDtypeStruct((mpad, cpad), jnp.float32),
        grid_spec=pltpu.PrefetchScalarGridSpec(
            num_scalar_prefetch=0,
            grid=grid,
            in_specs=[
                pl.BlockSpec((tm, k), lambda i: (i, 0)),       # LHS M-tile
                pl.BlockSpec((k, cpad), lambda i: (0, 0)),     # resident weight
                pl.BlockSpec((1, cpad), lambda i: (0, 0)),     # resident shift
            ],
            out_specs=pl.BlockSpec((tm, cpad), lambda i: (i, 0)),
        ),
        compiler_params=pltpu.CompilerParams(
            dimension_semantics=("parallel",),
            vmem_limit_bytes=48 * 1024 * 1024),
        cost_estimate=pl.CostEstimate(flops=int(flops), transcendentals=0,
                                      bytes_accessed=int(bytes_accessed)),
    )(cols, wcol, shift)


# ------------------------------ weight folding --------------------------------
def logpolar_bin_onehot(kernel=KH, num_levels=NUM_LEVELS, ang_levels=ANG_LEVELS,
                        facbase=FACBASE):
    """(kernel, kernel, 4, 3): window offset -> its log-polar bin (row, col), 1/bin_size."""
    half = kernel // 2
    rows, cols = 4, 3                                # num_levels * ang_levels = 12 = 4x3
    assign = np.full((kernel, kernel), -1, dtype=np.int64)
    for dy in range(-half, half + 1):
        for dx in range(-half, half + 1):
            if dy == 0 and dx == 0:
                continue                             # centre handled by centerconv1
            r = max(abs(dy), abs(dx))
            level = 0 if r <= facbase else 1
            ang = math.atan2(float(dy), float(dx)) % (2.0 * math.pi)
            sector = min(int(ang / (2.0 * math.pi / ang_levels)), ang_levels - 1)
            assign[dy + half, dx + half] = level * ang_levels + sector
    counts = np.zeros((num_levels * ang_levels,), dtype=np.float64)
    for b in assign.ravel():
        if b >= 0:
            counts[b] += 1
    counts = np.maximum(counts, 1.0)
    onehot = np.zeros((kernel, kernel, rows, cols), dtype=np.float32)
    for y in range(kernel):
        for x in range(kernel):
            b = assign[y, x]
            if b >= 0:
                onehot[y, x, b // cols, b % cols] = 1.0 / counts[b]
    return jnp.asarray(onehot)


def fold_block_params(params):
    """Fold logpl1 + conv1 + centerconv1 + BN1(eval) + identity residual -> (W_9x9, shift)."""
    onehot = logpolar_bin_onehot()
    w_eff = jnp.einsum('oirs,yxrs->oiyx', params['conv1_w'], onehot)        # (O, I, 9, 9)
    w_eff = w_eff.at[:, :, CENTER, CENTER].add(params['cc_w'][:, :, 0, 0])  # centerconv1
    scale = params['bn1_g'] / jnp.sqrt(params['bn1_v'] + EPS)
    shift = params['bn1_b'] - params['bn1_m'] * scale + scale * params['cc_b']
    w_fold = w_eff * scale[:, None, None, None]                             # BN scale into W
    planes = w_fold.shape[0]
    idx = jnp.arange(planes)
    w_fold = w_fold.at[idx, idx, CENTER, CENTER].add(1.0)                   # identity residual
    return w_fold, shift


# ------------------------- BasicBlockLogS forward ------------------------------
def basic_block_logs_forward_nhwc(x_nhwc, params, stride=1,
                                  compute_dtype=jnp.bfloat16):
    """NHWC entry point (preferred: lets the next block avoid NCHW relayouts)."""
    assert stride == 1, "downsample=None path requires stride == 1"
    n, h, w, cin = x_nhwc.shape
    planes = params['bn1_g'].shape[0]
    assert cin == planes, "downsample=None path requires inplanes == planes"

    # ---- fold parameters into one 9x9 conv + shift, K-packed for the MXU ----
    w_fold, shift = fold_block_params(params)                   # f32 folding
    cpad = _round_up(planes, LANE)                               # lane-dense Cout
    k = KH * KW * cin                                            # packed contraction
    wcol = jnp.transpose(w_fold, (2, 3, 1, 0)).reshape(k, planes)   # (dy,dx,c) major
    wcol = jnp.pad(wcol, ((0, 0), (0, cpad - planes))).astype(compute_dtype)
    shift_p = jnp.pad(shift, (0, cpad - planes)).reshape(1, cpad).astype(jnp.float32)

    # ---- im2col staging in compute dtype (bf16 by default, cast BEFORE pad) ----
    x = x_nhwc.astype(compute_dtype)
    xpad = jnp.pad(x, ((0, 0), (PAD, PAD), (PAD, PAD), (0, 0)))
    cols = jnp.concatenate(
        [xpad[:, dy:dy + h, dx:dx + w, :] for dy in range(KH) for dx in range(KW)],
        axis=-1).reshape(n * h * w, k)                           # (M, 81*cin)

    m = n * h * w
    tm = _pick_tm(m, k, cpad, jnp.dtype(compute_dtype).itemsize)
    mpad = _round_up(m, tm)
    if mpad != m:
        cols = jnp.pad(cols, ((0, mpad - m), (0, 0)))            # zero rows, sliced away

    out = fused_conv_bn_res_relu(cols, wcol, shift_p,
                                 m=m, tm=tm, k=k, cpad=cpad, planes=planes)
    return out[:m, :planes].reshape(n, h, w, planes)


def basic_block_logs_forward(x_nchw, params, stride=1, compute_dtype=jnp.bfloat16):
    """NCHW wrapper matching the PyTorch module layout (adds one relayout each way)."""
    x = jnp.transpose(x_nchw, (0, 2, 3, 1))
    out = basic_block_logs_forward_nhwc(x, params, stride=stride,
                                        compute_dtype=compute_dtype)
    return jnp.transpose(out, (0, 3, 1, 2))


# ------------------------- module parameters (eval mode) -----------------------
def init_params(key, inplanes, planes):
    ks = jax.random.split(key, 7)

    def nrm(k, shape, s=0.1):
        return s * jax.random.normal(k, shape, jnp.float32)

    return dict(
        conv1_w=nrm(ks[0], (planes, inplanes, 4, 3)),    # conv1: kernel (4,3), stride (4,3)
        cc_w=nrm(ks[1], (planes, inplanes, 1, 1)),       # centerconv1 (1x1, with bias)
        cc_b=nrm(ks[2], (planes,)),
        bn1_g=1.0 + 0.1 * jax.random.normal(ks[3], (planes,), jnp.float32),
        bn1_b=nrm(ks[4], (planes,)),
        bn1_m=nrm(ks[5], (planes,)),
        bn1_v=jnp.abs(1.0 + 0.1 * jax.random.normal(ks[6], (planes,), jnp.float32)),
    )


# ----------------------- pure-JAX reference (self-check) -----------------------
def ref_forward(x_nchw, params):
    """Mirrors the PyTorch forward: logpl1 -> conv1, + centerconv1, BN1, +x, ReLU."""
    x = jnp.transpose(x_nchw, (0, 2, 3, 1)).astype(jnp.float32)
    n, h, w, cin = x.shape
    onehot = logpolar_bin_onehot()
    xpad = jnp.pad(x, ((0, 0), (PAD, PAD), (PAD, PAD), (0, 0)))
    patches = jnp.stack(
        [jnp.stack([xpad[:, dy:dy + h, dx:dx + w, :] for dx in range(KW)], axis=3)
         for dy in range(KH)], axis=3)                                # (n,h,w,KH,KW,c)
    pooled = jnp.einsum('nhwyxc,yxrs->nhwrsc', patches, onehot)       # logpl1 (4x3 bins)
    out1 = jnp.einsum('nhwrsc,ocrs->nhwo', pooled, params['conv1_w'])  # conv1 (4,3)/(4,3)
    outc = jnp.einsum('nhwc,oc->nhwo', x, params['cc_w'][:, :, 0, 0]) + params['cc_b']
    out = out1 + outc
    out = (out - params['bn1_m']) / jnp.sqrt(params['bn1_v'] + EPS) \
        * params['bn1_g'] + params['bn1_b']
    out = jnp.maximum(out + x, 0.0)
    return jnp.transpose(out, (0, 3, 1, 2))


if __name__ == "__main__":
    key = jax.random.PRNGKey(0)
    k_x, k_p = jax.random.split(key)

    N, PLANES, H, W = 2, 8, 16, 16       # inplanes == planes, stride=1, downsample=None
    x = jax.random.normal(k_x, (N, PLANES, H, W), jnp.float32)
    params = init_params(k_p, PLANES, PLANES)

    ref = jax.block_until_ready(ref_forward(x, params))

    # Exact-mode check: f32 MXU operands, tight tolerance.
    out32 = jax.block_until_ready(
        basic_block_logs_forward(x, params, stride=1, compute_dtype=jnp.float32))
    assert out32.shape == (N, PLANES, H, W), out32.shape
    np.testing.assert_allclose(np.asarray(out32), np.asarray(ref), rtol=2e-3, atol=2e-3)

    # Performance mode (default): bf16 MXU operands, f32 accumulation.
    out = jax.block_until_ready(basic_block_logs_forward(x, params, stride=1))
    assert out.shape == (N, PLANES, H, W), out.shape
    np.testing.assert_allclose(np.asarray(out), np.asarray(ref), rtol=6e-2, atol=8e-2)

    print("KERNEL_OK")
</pallas_src>

<mosaic_0001>
module attributes {stable_mosaic.version = 11 : i64} {
  func.func @_matmul_bias_relu_kernel(%arg0: i32, %arg1: memref<128x648xf32, #tpu.memory_space<vmem>>, %arg2: memref<648x128xf32, #tpu.memory_space<vmem>>, %arg3: memref<1x128xf32, #tpu.memory_space<vmem>>, %arg4: memref<128x128xf32, #tpu.memory_space<vmem>>) attributes {dimension_semantics = [#tpu.dimension_semantics<parallel>], iteration_bounds = array<i64: 4>, scalar_prefetch = 0 : i64, scratch_operands = 0 : i64, tpu.core_type = #tpu.core_type<tc>, window_params = [{transform_indices = @transform_0, window_bounds = array<i64: 128, 648>}, {pipeline_mode = #tpu.pipeline_mode<synchronous>, transform_indices = @transform_1, window_bounds = array<i64: 648, 128>}, {pipeline_mode = #tpu.pipeline_mode<synchronous>, transform_indices = @transform_2, window_bounds = array<i64: 1, 128>}, {transform_indices = @transform_3, window_bounds = array<i64: 128, 128>}]} {
    %c0 = arith.constant 0 : index
    %c0_0 = arith.constant 0 : index
    %0 = vector.load %arg1[%c0, %c0_0] : memref<128x648xf32, #tpu.memory_space<vmem>>, vector<128x648xf32>
    %c0_1 = arith.constant 0 : index
    %c0_2 = arith.constant 0 : index
    %1 = vector.load %arg2[%c0_1, %c0_2] : memref<648x128xf32, #tpu.memory_space<vmem>>, vector<648x128xf32>
    %cst = arith.constant dense<0.000000e+00> : vector<128x128xf32>
    %2 = tpu.matmul %0, %1, %cst {dimension_numbers = #tpu.dot_dimension_numbers<[1], [0], [0], [1], [0, 0, 1, 1], [], []>} : vector<128x648xf32>, vector<648x128xf32>, vector<128x128xf32> -> vector<128x128xf32>
    %c0_3 = arith.constant 0 : index
    %c0_4 = arith.constant 0 : index
    %3 = vector.load %arg3[%c0_3, %c0_4] : memref<1x128xf32, #tpu.memory_space<vmem>>, vector<1x128xf32>
    %4 = vector.broadcast %3 : vector<1x128xf32> to vector<128x128xf32>
    %5 = arith.addf %2, %4 : vector<128x128xf32>
    %cst_5 = arith.constant 0.000000e+00 : f32
    %6 = vector.broadcast %cst_5 : f32 to vector<128x128xf32>
    %7 = arith.maximumf %5, %6 : vector<128x128xf32>
    %c0_6 = arith.constant 0 : index
    %c0_7 = arith.constant 0 : index
    %8 = vector.load %arg4[%c0_6, %c0_7] : memref<128x128xf32, #tpu.memory_space<vmem>>, vector<128x128xf32>
    tpu.vector_store %arg4[%c0_6, %c0_7], %7 {strides = array<i32>} : memref<128x128xf32, #tpu.memory_space<vmem>>, vector<128x128xf32>,
    return
  }
  func.func @transform_0(%arg0: i32) -> (i32, i32) {
    %c0_i32 = arith.constant 0 : i32
    %c0_i32_0 = arith.constant 0 : i32
    return %arg0, %c0_i32 : i32, i32
  }
  func.func @transform_1(%arg0: i32) -> (i32, i32) {
    %c0_i32 = arith.constant 0 : i32
    %c0_i32_0 = arith.constant 0 : i32
    %c0_i32_1 = arith.constant 0 : i32
    return %c0_i32, %c0_i32_0 : i32, i32
  }
  func.func @transform_2(%arg0: i32) -> (i32, i32) {
    %c0_i32 = arith.constant 0 : i32
    %c0_i32_0 = arith.constant 0 : i32
    %c0_i32_1 = arith.constant 0 : i32
    return %c0_i32, %c0_i32_0 : i32, i32
  }
  func.func @transform_3(%arg0: i32) -> (i32, i32) {
    %c0_i32 = arith.constant 0 : i32
    %c0_i32_0 = arith.constant 0 : i32
    return %arg0, %c0_i32 : i32, i32
  }
}

</mosaic_0001>

<llo_original>
// kernel: tpu_custom_call.1
$region0: #{tpu_custom_call.1}
  #allocation0 [shape = 'u32[]', space=smem, size = 0x4, offset = 0x4, fixed_abs, tag = 'smem constant byte address 0x4 - core index']
  #allocation1 [shape = 'u32[72,128]{1,0:T(1,128)}', space=vmem, size = 0x9000, scoped, tag = 'internal scratch']
  %s0 = inlined_call_operand.vmem [shape: f32[512,648], index: 0, kind: input, shape index: {}]
  %s1 = inlined_call_operand.vmem [shape: f32[648,128], index: 1, kind: input, shape index: {}]
  %s2 = inlined_call_operand.vmem [shape: f32[1,128], index: 2, kind: input, shape index: {}]
  %s3 = inlined_call_operand.hbm [shape: f32[512,128], index: 3, kind: output, shape index: {}]
  %s4 = sld [smem:[#allocation0]]
  $region45: #{tpu_custom_call.1} parent=0
    _
  %s6 = ssub.s32 1, %s4
  %s7 = scalar_select 0, %s6, %s4
  $region1: #{tpu_custom_call.1} parent=0
    #allocation2 [shape = 'u8[131072]{0}', space=vmem, size = 0x20000, scoped, tag = 'output window, operand 0']
    #allocation3 [shape = 's32[2]{0}', space=sflag, size = 0x8, scoped, tag = 'scoped memory for tpu_custom_call.1']
    %8 = vsyncpa [#allocation3], 0
    %s9 = scalar_lea.sflag [#allocation3], 1
    %10 = vsyncpa %s9, 0
    loop: start=0, step=1, limit=6
    $region2: #{tpu_custom_call.1} parent=1 // loop_pre_header
      _
    $region3: #{tpu_custom_call.1} parent=1 // loop_header
      %s12 = sphi 0, %s16
      %p13 = scmp.ge.s32.totalorder %s12, 6
      %s22 = sphi 0, %s24
      %s25 = sphi 0, %s22
      %s26 = sphi 0, %s25
      %s42 = sphi 0, %s26
      %s46 = sphi 0, %s46
      %s48 = sphi 0, %s46
      %s49 = sphi 0, %s48
      %s63 = sphi 0, %s49
      %s67 = sphi 0, %s67
      %s69 = sphi 0, %s67
      %s70 = sphi 0, %s69
      %s84 = sphi 0, %s70
      %s90 = sphi 0, %s92
      %s93 = sphi 0, %s90
      %s94 = sphi 0, %s93
      %s110 = sphi 0, %s94
    $region4: #{tpu_custom_call.1} parent=1 // loop_header_branch
      %15 = sbr.rel (%p13) target = $region8
    $region5: #{tpu_custom_call.1} parent=1 // loop_body
      %s17 = ssub.s32 %s12, 1
      %s18 = ssub.s32 %s12, 2
      %s19 = sadd.s32 %s12, 1
      %s20 = ssub.s32 %s12, %s19
      %p21 = scmp.eq.s32.totalorder %s20, 0
      %s23 = sadd.s32 %s22, 1
      %s24 = scalar_select %p21, %s22, %s23
      %p27 = pneg %p21
      %p28 = scmp.eq.s32.totalorder %s12, 3
      %p29 = por %p27, %p28
      %p30 = scmp.ne.s32.totalorder %s22, %s25
      %p31 = scmp.eq.s32.totalorder %s12, 0
      %p32 = por %p30, %p31
      %p33 = scmp.ne.s32.totalorder %s22, %s25
      %p34 = scmp.eq.s32.totalorder %s17, 3
      %p35 = por %p33, %p34
      %p36 = scmp.ne.s32.totalorder %s25, %s26
      %p37 = scmp.eq.s32.totalorder %s17, 0
      %p38 = por %p36, %p37
      %p39 = scmp.ne.s32.totalorder %s25, %s26
      %p40 = scmp.eq.s32.totalorder %s18, 3
      %p41 = por %p39, %p40
      %p43 = scmp.ne.s32.totalorder %s26, %s42
      %p44 = scmp.eq.s32.totalorder %s18, 0
      %p45 = por %p43, %p44
      %s47 = sadd.s32 %s46, 1
      %p50 = scmp.eq.s32.totalorder %s12, 3
      %p51 = scmp.ne.s32.totalorder %s46, %s48
      %p52 = scmp.eq.s32.totalorder %s12, 0
      %p53 = por %p51, %p52
      %p54 = scmp.ne.s32.totalorder %s46, %s48
      %p55 = scmp.eq.s32.totalorder %s17, 3
      %p56 = por %p54, %p55
      %p57 = scmp.ne.s32.totalorder %s48, %s49
      %p58 = scmp.eq.s32.totalorder %s17, 0
      %p59 = por %p57, %p58
      %p60 = scmp.ne.s32.totalorder %s48, %s49
      %p61 = scmp.eq.s32.totalorder %s18, 3
      %p62 = por %p60, %p61
      %p64 = scmp.ne.s32.totalorder %s49, %s63
      %p65 = scmp.eq.s32.totalorder %s18, 0
      %p66 = por %p64, %p65
      %s68 = sadd.s32 %s67, 1
      %p71 = scmp.eq.s32.totalorder %s12, 3
      %p72 = scmp.ne.s32.totalorder %s67, %s69
      %p73 = scmp.eq.s32.totalorder %s12, 0
      %p74 = por %p72, %p73
      %p75 = scmp.ne.s32.totalorder %s67, %s69
      %p76 = scmp.eq.s32.totalorder %s17, 3
      %p77 = por %p75, %p76
      %p78 = scmp.ne.s32.totalorder %s69, %s70
      %p79 = scmp.eq.s32.totalorder %s17, 0
      %p80 = por %p78, %p79
      %p81 = scmp.ne.s32.totalorder %s69, %s70
      %p82 = scmp.eq.s32.totalorder %s18, 3
      %p83 = por %p81, %p82
      %p85 = scmp.ne.s32.totalorder %s70, %s84
      %p86 = scmp.eq.s32.totalorder %s18, 0
      %p87 = por %p85, %p86
      %s88 = ssub.s32 %s12, %s19
      %p89 = scmp.eq.s32.totalorder %s88, 0
      %s91 = sadd.s32 %s90, 1
      %s92 = scalar_select %p89, %s90, %s91
      %p95 = pneg %p89
      %p96 = scmp.eq.s32.totalorder %s12, 3
      %p97 = por %p95, %p96
      %p98 = scmp.ne.s32.totalorder %s90, %s93
      %p99 = scmp.eq.s32.totalorder %s12, 0
      %p100 = por %p98, %p99
      %p101 = scmp.ne.s32.totalorder %s90, %s93
      %p102 = scmp.eq.s32.totalorder %s17, 3
      %p103 = por %p101, %p102
      %p104 = scmp.ne.s32.totalorder %s93, %s94
      %p105 = scmp.eq.s32.totalorder %s17, 0
      %p106 = por %p104, %p105
      %p107 = scmp.ne.s32.totalorder %s93, %s94
      %p108 = scmp.eq.s32.totalorder %s18, 3
      %p109 = por %p107, %p108
      %p111 = scmp.ne.s32.totalorder %s94, %s110
      %p112 = scmp.eq.s32.totalorder %s18, 0
      %p113 = por %p111, %p112
      %p114 = scmp.le.s32.totalorder 1, %s12
      %p115 = scmp.lt.s32.totalorder %s12, 5
      %p116 = pnand %p114, %p115
      %p117 = pneg %p116
      // Predicated region
      $region9: #{tpu_custom_call.1} parent=5 // pred_check
        _
      $region10: #{tpu_custom_call.1} parent=5 // pred_check_branch
        %119 = sbr.rel (%p116) target = $region12
      $region11: #{tpu_custom_call.1} parent=5 // pred_region
        %s120 = ssub.s32 %s12, 1
        // Predicated region
        $region13: #{tpu_custom_call.1} parent=11 // pred_check
          %p121 = pneg %p59
        $region14: #{tpu_custom_call.1} parent=11 // pred_check_branch
          %123 = sbr.rel (%p121) target = $region16
        $region15: #{tpu_custom_call.1} parent=11 // pred_region
          _
        $region16: #{tpu_custom_call.1} parent=11 // pred_fallthru
          _
        // Predicated region
        $region17: #{tpu_custom_call.1} parent=11 // pred_check
          %p124 = pneg %p80
        $region18: #{tpu_custom_call.1} parent=11 // pred_check_branch
          %126 = sbr.rel (%p124) target = $region20
        $region19: #{tpu_custom_call.1} parent=11 // pred_region
          _
        $region20: #{tpu_custom_call.1} parent=11 // pred_fallthru
          _
      $region12: #{tpu_custom_call.1} parent=5 // pred_fallthru
        _
      %p127 = scmp.lt.s32.totalorder %s12, 4
      // Predicated region
      $region21: #{tpu_custom_call.1} parent=5 // pred_check
        %p128 = pneg %p127
      $region22: #{tpu_custom_call.1} parent=5 // pred_check_branch
        %130 = sbr.rel (%p128) target = $region24
      $region23: #{tpu_custom_call.1} parent=5 // pred_region
        // Predicated region
        $region25: #{tpu_custom_call.1} parent=23 // pred_check
          %p131 = pneg %p32
        $region26: #{tpu_custom_call.1} parent=23 // pred_check_branch
          %133 = sbr.rel (%p131) target = $region28
        $region27: #{tpu_custom_call.1} parent=23 // pred_region
          %s134 = smul.u32 16, %s12
          %p135 = scmp.lt.s32.totalorder %s134, 63
          %s136 = scalar_select %p135, %s134, 63
          %s137 = smul.addr %s136, 6
          %s138 = smul.addr %s137, 8
          %s139 = scalar_lea.vmem %s0, %s138
          %s140 = smul.u32 16, %s12
        $region28: #{tpu_custom_call.1} parent=23 // pred_fallthru
          _
      $region24: #{tpu_custom_call.1} parent=5 // pred_fallthru
        _
      %p141 = scmp.le.s32.totalorder 1, %s12
      %p142 = scmp.lt.s32.totalorder %s12, 5
      %p143 = pnand %p141, %p142
      %p144 = pneg %p143
      // Predicated region
      $region29: #{tpu_custom_call.1} parent=5 // pred_check
        _
      $region30: #{tpu_custom_call.1} parent=5 // pred_check_branch
        %146 = sbr.rel (%p143) target = $region32
      $region31: #{tpu_custom_call.1} parent=5 // pred_region
        %s147 = ssub.s32 %s12, 1
        %s148 = smul.u32 16, %s17
        %p149 = scmp.lt.s32.totalorder %s148, 63
        %s150 = scalar_select %p149, %s148, 63
        %s151 = smul.addr %s150, 6
        %s152 = smul.addr %s151, 8
        %s153 = scalar_lea.vmem %s0, %s152
        %p154 = pneg %p38
        %p155 = pneg %p35
        %p156 = pneg %p59
        %p157 = pneg %p56
        %p158 = pneg %p80
        %p159 = pneg %p77
        %p160 = pneg %p106
        %p161 = pneg %p103
        %s162 = sand.u32 %s93, 1
        %s163 = scalar_lea.sflag [#allocation3], %s162
        %s164 = sand.u32 %s93, 1
        %s165 = smul.addr %s164, 128
        %s166 = scalar_lea.vmem [#allocation2], %s165
        %s167 = smul.u32 16, %s17
        %p168 = scmp.lt.s32.totalorder %s167, 63
        %s169 = scalar_select %p168, %s167, 63
        %s170 = smul.addr %s169, 6
        %s171 = smul.addr %s170, 8
        %s172 = scalar_lea.vmem %s0, %s171
        %s173 = smul.u32 16, %s17
        %s174 = smul.u32 16, %s17
        %v175 = vld [vmem:[%s172] sm:$0xff]
        %v176 = vld [vmem:[%s172 + $0x8] sm:$0xff]
        %v177 = vld [vmem:[%s172 + $0x10] sm:$0xff]
        %v178 = vld [vmem:[%s172 + $0x18] sm:$0xff]
        %v179 = vld [vmem:[%s172 + $0x20] sm:$0xff]
        %v180 = vld [vmem:[%s172 + $0x28] sm:$0xff]
        %v181 = vld [vmem:[%s172 + $0x30] sm:$0xff]
        %v182 = vld [vmem:[%s172 + $0x38] sm:$0xff]
        %v183 = vld [vmem:[%s172 + $0x40] sm:$0xff]
        %v184 = vld [vmem:[%s172 + $0x48] sm:$0xff]
        %v185 = vld [vmem:[%s172 + $0x50] sm:$0xff]
        %v186 = vld [vmem:[%s172 + $0x58] sm:$0xff]
        %v187 = vld [vmem:[%s172 + $0x60] sm:$0xff]
        %v188 = vld [vmem:[%s172 + $0x68] sm:$0xff]
        %v189 = vld [vmem:[%s172 + $0x70] sm:$0xff]
        %v190 = vld [vmem:[%s172 + $0x78] sm:$0xff]
        %v191 = vld [vmem:[%s172 + $0x80] sm:$0xff]
        %v192 = vld [vmem:[%s172 + $0x88] sm:$0xff]
        %v193 = vld [vmem:[%s172 + $0x90] sm:$0xff]
        %v194 = vld [vmem:[%s172 + $0x98] sm:$0xff]
        %v195 = vld [vmem:[%s172 + $0xa0] sm:$0xff]
        %v196 = vld [vmem:[%s172 + $0xa8] sm:$0xff]
        %v197 = vld [vmem:[%s172 + $0xb0] sm:$0xff]
        %v198 = vld [vmem:[%s172 + $0xb8] sm:$0xff]
        %v199 = vld [vmem:[%s172 + $0xc0] sm:$0xff]
        %v200 = vld [vmem:[%s172 + $0xc8] sm:$0xff]
        %v201 = vld [vmem:[%s172 + $0xd0] sm:$0xff]
        %v202 = vld [vmem:[%s172 + $0xd8] sm:$0xff]
        %v203 = vld [vmem:[%s172 + $0xe0] sm:$0xff]
        %v204 = vld [vmem:[%s172 + $0xe8] sm:$0xff]
        %v205 = vld [vmem:[%s172 + $0xf0] sm:$0xff]
        %v206 = vld [vmem:[%s172 + $0xf8] sm:$0xff]
        %v207 = vld [vmem:[%s172 + $0x100] sm:$0xff]
        %v208 = vld [vmem:[%s172 + $0x108] sm:$0xff]
        %v209 = vld [vmem:[%s172 + $0x110] sm:$0xff]
        %v210 = vld [vmem:[%s172 + $0x118] sm:$0xff]
        %v211 = vld [vmem:[%s172 + $0x120] sm:$0xff]
        %v212 = vld [vmem:[%s172 + $0x128] sm:$0xff]
        %v213 = vld [vmem:[%s172 + $0x130] sm:$0xff]
        %v214 = vld [vmem:[%s172 + $0x138] sm:$0xff]
        %v215 = vld [vmem:[%s172 + $0x140] sm:$0xff]
        %v216 = vld [vmem:[%s172 + $0x148] sm:$0xff]
        %v217 = vld [vmem:[%s172 + $0x150] sm:$0xff]
        %v218 = vld [vmem:[%s172 + $0x158] sm:$0xff]
        %v219 = vld [vmem:[%s172 + $0x160] sm:$0xff]
        %v220 = vld [vmem:[%s172 + $0x168] sm:$0xff]
        %v221 = vld [vmem:[%s172 + $0x170] sm:$0xff]
        %v222 = vld [vmem:[%s172 + $0x178] sm:$0xff]
        %v223 = vld [vmem:[%s172 + $0x180] sm:$0xff]
        %v224 = vld [vmem:[%s172 + $0x188] sm:$0xff]
        %v225 = vld [vmem:[%s172 + $0x190] sm:$0xff]
        %v226 = vld [vmem:[%s172 + $0x198] sm:$0xff]
        %v227 = vld [vmem:[%s172 + $0x1a0] sm:$0xff]
        %v228 = vld [vmem:[%s172 + $0x1a8] sm:$0xff]
        %v229 = vld [vmem:[%s172 + $0x1b0] sm:$0xff]
        %v230 = vld [vmem:[%s172 + $0x1b8] sm:$0xff]
        %v231 = vld [vmem:[%s172 + $0x1c0] sm:$0xff]
        %v232 = vld [vmem:[%s172 + $0x1c8] sm:$0xff]
        %v233 = vld [vmem:[%s172 + $0x1d0] sm:$0xff]
        %v234 = vld [vmem:[%s172 + $0x1d8] sm:$0xff]
        %v235 = vld [vmem:[%s172 + $0x1e0] sm:$0xff]
        %v236 = vld [vmem:[%s172 + $0x1e8] sm:$0xff]
        %v237 = vld [vmem:[%s172 + $0x1f0] sm:$0xff]
        %v238 = vld [vmem:[%s172 + $0x1f8] sm:$0xff]
        %v239 = vld [vmem:[%s172 + $0x200] sm:$0xff]
        %v240 = vld [vmem:[%s172 + $0x208] sm:$0xff]
        %v241 = vld [vmem:[%s172 + $0x210] sm:$0xff]
        %v242 = vld [vmem:[%s172 + $0x218] sm:$0xff]
        %v243 = vld [vmem:[%s172 + $0x220] sm:$0xff]
        %v244 = vld [vmem:[%s172 + $0x228] sm:$0xff]
        %v245 = vld [vmem:[%s172 + $0x230] sm:$0xff]
        %v246 = vld [vmem:[%s172 + $0x238] sm:$0xff]
        %v247 = vld [vmem:[%s172 + $0x240] sm:$0xff]
        %v248 = vld [vmem:[%s172 + $0x248] sm:$0xff]
        %v249 = vld [vmem:[%s172 + $0x250] sm:$0xff]
        %v250 = vld [vmem:[%s172 + $0x258] sm:$0xff]
        %v251 = vld [vmem:[%s172 + $0x260] sm:$0xff]
        %v252 = vld [vmem:[%s172 + $0x268] sm:$0xff]
        %v253 = vld [vmem:[%s172 + $0x270] sm:$0xff]
        %v254 = vld [vmem:[%s172 + $0x278] sm:$0xff]
        %v255 = vld [vmem:[%s172 + $0x280] sm:$0xff]
        %v256 = vld [vmem:[%s172 + $0x288] sm:$0xff]
        %v257 = vld [vmem:[%s172 + $0x290] sm:$0xff]
        %v258 = vld [vmem:[%s172 + $0x298] sm:$0xff]
        %v259 = vld [vmem:[%s172 + $0x2a0] sm:$0xff]
        %v260 = vld [vmem:[%s172 + $0x2a8] sm:$0xff]
        %v261 = vld [vmem:[%s172 + $0x2b0] sm:$0xff]
        %v262 = vld [vmem:[%s172 + $0x2b8] sm:$0xff]
        %v263 = vld [vmem:[%s172 + $0x2c0] sm:$0xff]
        %v264 = vld [vmem:[%s172 + $0x2c8] sm:$0xff]
        %v265 = vld [vmem:[%s172 + $0x2d0] sm:$0xff]
        %v266 = vld [vmem:[%s172 + $0x2d8] sm:$0xff]
        %v267 = vld [vmem:[%s172 + $0x2e0] sm:$0xff]
        %v268 = vld [vmem:[%s172 + $0x2e8] sm:$0xff]
        %v269 = vld [vmem:[%s172 + $0x2f0] sm:$0xff]
        %v270 = vld [vmem:[%s172 + $0x2f8] sm:$0xff]
        %v271 = vld [vmem:[%s1] sm:$0xff]
        %v272 = vld [vmem:[%s1 + $0x8] sm:$0xff]
        %v273 = vld [vmem:[%s1 + $0x10] sm:$0xff]
        %v274 = vld [vmem:[%s1 + $0x18] sm:$0xff]
        %v275 = vld [vmem:[%s1 + $0x20] sm:$0xff]
        %v276 = vld [vmem:[%s1 + $0x28] sm:$0xff]
        %v277 = vld [vmem:[%s1 + $0x30] sm:$0xff]
        %v278 = vld [vmem:[%s1 + $0x38] sm:$0xff]
        %v279 = vld [vmem:[%s1 + $0x40] sm:$0xff]
        %v280 = vld [vmem:[%s1 + $0x48] sm:$0xff]
        %v281 = vld [vmem:[%s1 + $0x50] sm:$0xff]
        %v282 = vld [vmem:[%s1 + $0x58] sm:$0xff]
        %v283 = vld [vmem:[%s1 + $0x60] sm:$0xff]
        %v284 = vld [vmem:[%s1 + $0x68] sm:$0xff]
        %v285 = vld [vmem:[%s1 + $0x70] sm:$0xff]
        %v286 = vld [vmem:[%s1 + $0x78] sm:$0xff]
        %v287 = vld [vmem:[%s1 + $0x80] sm:$0xff]
        %v288 = vld [vmem:[%s1 + $0x88] sm:$0xff]
        %v289 = vld [vmem:[%s1 + $0x90] sm:$0xff]
        %v290 = vld [vmem:[%s1 + $0x98] sm:$0xff]
        %v291 = vld [vmem:[%s1 + $0xa0] sm:$0xff]
        %v292 = vld [vmem:[%s1 + $0xa8] sm:$0xff]
        %v293 = vld [vmem:[%s1 + $0xb0] sm:$0xff]
        %v294 = vld [vmem:[%s1 + $0xb8] sm:$0xff]
        %v295 = vld [vmem:[%s1 + $0xc0] sm:$0xff]
        %v296 = vld [vmem:[%s1 + $0xc8] sm:$0xff]
        %v297 = vld [vmem:[%s1 + $0xd0] sm:$0xff]
        %v298 = vld [vmem:[%s1 + $0xd8] sm:$0xff]
        %v299 = vld [vmem:[%s1 + $0xe0] sm:$0xff]
        %v300 = vld [vmem:[%s1 + $0xe8] sm:$0xff]
        %v301 = vld [vmem:[%s1 + $0xf0] sm:$0xff]
        %v302 = vld [vmem:[%s1 + $0xf8] sm:$0xff]
        %v303 = vld [vmem:[%s1 + $0x100] sm:$0xff]
        %v304 = vld [vmem:[%s1 + $0x108] sm:$0xff]
        %v305 = vld [vmem:[%s1 + $0x110] sm:$0xff]
        %v306 = vld [vmem:[%s1 + $0x118] sm:$0xff]
        %v307 = vld [vmem:[%s1 + $0x120] sm:$0xff]
        %v308 = vld [vmem:[%s1 + $0x128] sm:$0xff]
        %v309 = vld [vmem:[%s1 + $0x130] sm:$0xff]
        %v310 = vld [vmem:[%s1 + $0x138] sm:$0xff]
        %v311 = vld [vmem:[%s1 + $0x140] sm:$0xff]
        %v312 = vld [vmem:[%s1 + $0x148] sm:$0xff]
        %v313 = vld [vmem:[%s1 + $0x150] sm:$0xff]
        %v314 = vld [vmem:[%s1 + $0x158] sm:$0xff]
        %v315 = vld [vmem:[%s1 + $0x160] sm:$0xff]
        %v316 = vld [vmem:[%s1 + $0x168] sm:$0xff]
        %v317 = vld [vmem:[%s1 + $0x170] sm:$0xff]
        %v318 = vld [vmem:[%s1 + $0x178] sm:$0xff]
        %v319 = vld [vmem:[%s1 + $0x180] sm:$0xff]
        %v320 = vld [vmem:[%s1 + $0x188] sm:$0xff]
        %v321 = vld [vmem:[%s1 + $0x190] sm:$0xff]
        %v322 = vld [vmem:[%s1 + $0x198] sm:$0xff]
        %v323 = vld [vmem:[%s1 + $0x1a0] sm:$0xff]
        %v324 = vld [vmem:[%s1 + $0x1a8] sm:$0xff]
        %v325 = vld [vmem:[%s1 + $0x1b0] sm:$0xff]
        %v326 = vld [vmem:[%s1 + $0x1b8] sm:$0xff]
        %v327 = vld [vmem:[%s1 + $0x1c0] sm:$0xff]
        %v328 = vld [vmem:[%s1 + $0x1c8] sm:$0xff]
        %v329 = vld [vmem:[%s1 + $0x1d0] sm:$0xff]
        %v330 = vld [vmem:[%s1 + $0x1d8] sm:$0xff]
        %v331 = vld [vmem:[%s1 + $0x1e0] sm:$0xff]
        %v332 = vld [vmem:[%s1 + $0x1e8] sm:$0xff]
        %v333 = vld [vmem:[%s1 + $0x1f0] sm:$0xff]
        %v334 = vld [vmem:[%s1 + $0x1f8] sm:$0xff]
        %v335 = vld [vmem:[%s1 + $0x200] sm:$0xff]
        %v336 = vld [vmem:[%s1 + $0x208] sm:$0xff]
        %v337 = vld [vmem:[%s1 + $0x210] sm:$0xff]
        %v338 = vld [vmem:[%s1 + $0x218] sm:$0xff]
        %v339 = vld [vmem:[%s1 + $0x220] sm:$0xff]
        %v340 = vld [vmem:[%s1 + $0x228] sm:$0xff]
        %v341 = vld [vmem:[%s1 + $0x230] sm:$0xff]
        %v342 = vld [vmem:[%s1 + $0x238] sm:$0xff]
        %v343 = vld [vmem:[%s1 + $0x240] sm:$0xff]
        %v344 = vld [vmem:[%s1 + $0x248] sm:$0xff]
        %v345 = vld [vmem:[%s1 + $0x250] sm:$0xff]
        %v346 = vld [vmem:[%s1 + $0x258] sm:$0xff]
        %v347 = vld [vmem:[%s1 + $0x260] sm:$0xff]
        %v348 = vld [vmem:[%s1 + $0x268] sm:$0xff]
        %v349 = vld [vmem:[%s1 + $0x270] sm:$0xff]
        %v350 = vld [vmem:[%s1 + $0x278] sm:$0xff]
        %v351 = vld [vmem:[%s1 + $0x280] sm:$0xff]
        %v352 = vld [vmem:[%s2] sm:$0x1]
        %v354 = vperm.slane %v352, 0
        %vm356 = vcmask 64512
        %v358 = vsel %vm356, %v180, 0
        %v361 = vsel %vm356, %v186, 0
        %v364 = vsel %vm356, %v192, 0
        %v367 = vsel %vm356, %v198, 0
        %v370 = vsel %vm356, %v204, 0
        %v373 = vsel %vm356, %v210, 0
        %v376 = vsel %vm356, %v216, 0
        %v379 = vsel %vm356, %v222, 0
        %v382 = vsel %vm356, %v228, 0
        %v385 = vsel %vm356, %v234, 0
        %v388 = vsel %vm356, %v240, 0
        %v391 = vsel %vm356, %v246, 0
        %v394 = vsel %vm356, %v252, 0
        %v397 = vsel %vm356, %v258, 0
        %v400 = vsel %vm356, %v264, 0
        %v403 = vsel %vm356, %v270, 0
        %405 = vmatpush.msra.mxu0 %v286
        %406 = vmatpush.msra.mxu0 %v285
        %407 = vmatpush.msra.mxu0 %v284
        %408 = vmatpush.msra.mxu0 %v283
        %409 = vmatpush.msra.mxu0 %v282
        %410 = vmatpush.msra.mxu0 %v281
        %411 = vmatpush.msra.mxu0 %v280
        %412 = vmatpush.msra.mxu0 %v279
        %413 = vmatpush.msra.mxu0 %v278
        %414 = vmatpush.msra.mxu0 %v277
        %415 = vmatpush.msra.mxu0 %v276
        %416 = vmatpush.msra.mxu0 %v275
        %417 = vmatpush.msra.mxu0 %v274
        %418 = vmatpush.msra.mxu0 %v273
        %419 = vmatpush.msra.mxu0 %v272
        %420 = vmatpush.msra.mxu0 %v271
        %421 = vmatmul.f32.gmra.mxu0 %v175
        %v422 = vpop.f32.mrf.mxu0
        %v423 = vadd.f32 %v354, %v422
        %424 = vmatmul.f32.gmra.mxu0 %v181
        %v425 = vpop.f32.mrf.mxu0
        %v426 = vadd.f32 %v354, %v425
        %427 = vmatmul.f32.gmra.mxu0 %v187
        %v428 = vpop.f32.mrf.mxu0
        %v429 = vadd.f32 %v354, %v428
        %430 = vmatmul.f32.gmra.mxu0 %v193
        %v431 = vpop.f32.mrf.mxu0
        %v432 = vadd.f32 %v354, %v431
        %433 = vmatmul.f32.gmra.mxu0 %v199
        %v434 = vpop.f32.mrf.mxu0
        %v435 = vadd.f32 %v354, %v434
        %436 = vmatmul.f32.gmra.mxu0 %v205
        %v437 = vpop.f32.mrf.mxu0
        %v438 = vadd.f32 %v354, %v437
        %439 = vmatmul.f32.gmra.mxu0 %v211
        %v440 = vpop.f32.mrf.mxu0
        %v441 = vadd.f32 %v354, %v440
        %442 = vmatmul.f32.gmra.mxu0 %v217
        %v443 = vpop.f32.mrf.mxu0
        %v444 = vadd.f32 %v354, %v443
        %445 = vmatmul.f32.gmra.mxu0 %v223
        %v446 = vpop.f32.mrf.mxu0
        %v447 = vadd.f32 %v354, %v446
        %448 = vmatmul.f32.gmra.mxu0 %v229
        %v449 = vpop.f32.mrf.mxu0
        %v450 = vadd.f32 %v354, %v449
        %451 = vmatmul.f32.gmra.mxu0 %v235
        %v452 = vpop.f32.mrf.mxu0
        %v453 = vadd.f32 %v354, %v452
        %454 = vmatmul.f32.gmra.mxu0 %v241
        %v455 = vpop.f32.mrf.mxu0
        %v456 = vadd.f32 %v354, %v455
        %457 = vmatmul.f32.gmra.mxu0 %v247
        %v458 = vpop.f32.mrf.mxu0
        %v459 = vadd.f32 %v354, %v458
        %460 = vmatmul.f32.gmra.mxu0 %v253
        %v461 = vpop.f32.mrf.mxu0
        %v462 = vadd.f32 %v354, %v461
        %463 = vmatmul.f32.gmra.mxu0 %v259
        %v464 = vpop.f32.mrf.mxu0
        %v465 = vadd.f32 %v354, %v464
        %466 = vmatmul.f32.gmra.mxu0 %v265
        %v467 = vpop.f32.mrf.mxu0
        %v468 = vadd.f32 %v354, %v467
        %469 = vdwg.mxu0
        %470 = vmatpush.msra.mxu0 %v302
        %471 = vmatpush.msra.mxu0 %v301
        %472 = vmatpush.msra.mxu0 %v300
        %473 = vmatpush.msra.mxu0 %v299
        %474 = vmatpush.msra.mxu0 %v298
        %475 = vmatpush.msra.mxu0 %v297
        %476 = vmatpush.msra.mxu0 %v296
        %477 = vmatpush.msra.mxu0 %v295
        %478 = vmatpush.msra.mxu0 %v294
        %479 = vmatpush.msra.mxu0 %v293
        %480 = vmatpush.msra.mxu0 %v292
        %481 = vmatpush.msra.mxu0 %v291
        %482 = vmatpush.msra.mxu0 %v290
        %483 = vmatpush.msra.mxu0 %v289
        %484 = vmatpush.msra.mxu0 %v288
        %485 = vmatpush.msra.mxu0 %v287
        %486 = vmatmul.f32.gmra.mxu0 %v176
        %v487 = vpop.f32.mrf.mxu0
        %v488 = vadd.f32 %v423, %v487
        %489 = vmatmul.f32.gmra.mxu0 %v182
        %v490 = vpop.f32.mrf.mxu0
        %v491 = vadd.f32 %v426, %v490
        %492 = vmatmul.f32.gmra.mxu0 %v188
        %v493 = vpop.f32.mrf.mxu0
        %v494 = vadd.f32 %v429, %v493
        %495 = vmatmul.f32.gmra.mxu0 %v194
        %v496 = vpop.f32.mrf.mxu0
        %v497 = vadd.f32 %v432, %v496
        %498 = vmatmul.f32.gmra.mxu0 %v200
        %v499 = vpop.f32.mrf.mxu0
        %v500 = vadd.f32 %v435, %v499
        %501 = vmatmul.f32.gmra.mxu0 %v206
        %v502 = vpop.f32.mrf.mxu0
        %v503 = vadd.f32 %v438, %v502
        %504 = vmatmul.f32.gmra.mxu0 %v212
        %v505 = vpop.f32.mrf.mxu0
        %v506 = vadd.f32 %v441, %v505
        %507 = vmatmul.f32.gmra.mxu0 %v218
        %v508 = vpop.f32.mrf.mxu0
        %v509 = vadd.f32 %v444, %v508
        %510 = vmatmul.f32.gmra.mxu0 %v224
        %v511 = vpop.f32.mrf.mxu0
        %v512 = vadd.f32 %v447, %v511
        %513 = vmatmul.f32.gmra.mxu0 %v230
        %v514 = vpop.f32.mrf.mxu0
        %v515 = vadd.f32 %v450, %v514
        %516 = vmatmul.f32.gmra.mxu0 %v236
        %v517 = vpop.f32.mrf.mxu0
        %v518 = vadd.f32 %v453, %v517
        %519 = vmatmul.f32.gmra.mxu0 %v242
        %v520 = vpop.f32.mrf.mxu0
        %v521 = vadd.f32 %v456, %v520
        %522 = vmatmul.f32.gmra.mxu0 %v248
        %v523 = vpop.f32.mrf.mxu0
        %v524 = vadd.f32 %v459, %v523
        %525 = vmatmul.f32.gmra.mxu0 %v254
        %v526 = vpop.f32.mrf.mxu0
        %v527 = vadd.f32 %v462, %v526
        %528 = vmatmul.f32.gmra.mxu0 %v260
        %v529 = vpop.f32.mrf.mxu0
        %v530 = vadd.f32 %v465, %v529
        %531 = vmatmul.f32.gmra.mxu0 %v266
        %v532 = vpop.f32.mrf.mxu0
        %v533 = vadd.f32 %v468, %v532
        %534 = vdwg.mxu0
        %535 = vmatpush.msra.mxu0 %v318
        %536 = vmatpush.msra.mxu0 %v317
        %537 = vmatpush.msra.mxu0 %v316
        %538 = vmatpush.msra.mxu0 %v315
        %539 = vmatpush.msra.mxu0 %v314
        %540 = vmatpush.msra.mxu0 %v313
        %541 = vmatpush.msra.mxu0 %v312
        %542 = vmatpush.msra.mxu0 %v311
        %543 = vmatpush.msra.mxu0 %v310
        %544 = vmatpush.msra.mxu0 %v309
        %545 = vmatpush.msra.mxu0 %v308
        %546 = vmatpush.msra.mxu0 %v307
        %547 = vmatpush.msra.mxu0 %v306
        %548 = vmatpush.msra.mxu0 %v305
        %549 = vmatpush.msra.mxu0 %v304
        %550 = vmatpush.msra.mxu0 %v303
        %551 = vmatmul.f32.gmra.mxu0 %v177
        %v552 = vpop.f32.mrf.mxu0
        %v553 = vadd.f32 %v488, %v552
        %554 = vmatmul.f32.gmra.mxu0 %v183
        %v555 = vpop.f32.mrf.mxu0
        %v556 = vadd.f32 %v491, %v555
        %557 = vmatmul.f32.gmra.mxu0 %v189
        %v558 = vpop.f32.mrf.mxu0
        %v559 = vadd.f32 %v494, %v558
        %560 = vmatmul.f32.gmra.mxu0 %v195
        %v561 = vpop.f32.mrf.mxu0
        %v562 = vadd.f32 %v497, %v561
        %563 = vmatmul.f32.gmra.mxu0 %v201
        %v564 = vpop.f32.mrf.mxu0
        %v565 = vadd.f32 %v500, %v564
        %566 = vmatmul.f32.gmra.mxu0 %v207
        %v567 = vpop.f32.mrf.mxu0
        %v568 = vadd.f32 %v503, %v567
        %569 = vmatmul.f32.gmra.mxu0 %v213
        %v570 = vpop.f32.mrf.mxu0
        %v571 = vadd.f32 %v506, %v570
        %572 = vmatmul.f32.gmra.mxu0 %v219
        %v573 = vpop.f32.mrf.mxu0
        %v574 = vadd.f32 %v509, %v573
        %575 = vmatmul.f32.gmra.mxu0 %v225
        %v576 = vpop.f32.mrf.mxu0
        %v577 = vadd.f32 %v512, %v576
        %578 = vmatmul.f32.gmra.mxu0 %v231
        %v579 = vpop.f32.mrf.mxu0
        %v580 = vadd.f32 %v515, %v579
        %581 = vmatmul.f32.gmra.mxu0 %v237
        %v582 = vpop.f32.mrf.mxu0
        %v583 = vadd.f32 %v518, %v582
        %584 = vmatmul.f32.gmra.mxu0 %v243
        %v585 = vpop.f32.mrf.mxu0
        %v586 = vadd.f32 %v521, %v585
        %587 = vmatmul.f32.gmra.mxu0 %v249
        %v588 = vpop.f32.mrf.mxu0
        %v589 = vadd.f32 %v524, %v588
        %590 = vmatmul.f32.gmra.mxu0 %v255
        %v591 = vpop.f32.mrf.mxu0
        %v592 = vadd.f32 %v527, %v591
        %593 = vmatmul.f32.gmra.mxu0 %v261
        %v594 = vpop.f32.mrf.mxu0
        %v595 = vadd.f32 %v530, %v594
        %596 = vmatmul.f32.gmra.mxu0 %v267
        %v597 = vpop.f32.mrf.mxu0
        %v598 = vadd.f32 %v533, %v597
        %599 = vdwg.mxu0
        %600 = vmatpush.msra.mxu0 %v334
        %601 = vmatpush.msra.mxu0 %v333
        %602 = vmatpush.msra.mxu0 %v332
        %603 = vmatpush.msra.mxu0 %v331
        %604 = vmatpush.msra.mxu0 %v330
        %605 = vmatpush.msra.mxu0 %v329
        %606 = vmatpush.msra.mxu0 %v328
        %607 = vmatpush.msra.mxu0 %v327
        %608 = vmatpush.msra.mxu0 %v326
        %609 = vmatpush.msra.mxu0 %v325
        %610 = vmatpush.msra.mxu0 %v324
        %611 = vmatpush.msra.mxu0 %v323
        %612 = vmatpush.msra.mxu0 %v322
        %613 = vmatpush.msra.mxu0 %v321
        %614 = vmatpush.msra.mxu0 %v320
        %615 = vmatpush.msra.mxu0 %v319
        %616 = vmatmul.f32.gmra.mxu0 %v178
        %v617 = vpop.f32.mrf.mxu0
        %v618 = vadd.f32 %v553, %v617
        %619 = vmatmul.f32.gmra.mxu0 %v184
        %v620 = vpop.f32.mrf.mxu0
        %v621 = vadd.f32 %v556, %v620
        %622 = vmatmul.f32.gmra.mxu0 %v190
        %v623 = vpop.f32.mrf.mxu0
        %v624 = vadd.f32 %v559, %v623
        %625 = vmatmul.f32.gmra.mxu0 %v196
        %v626 = vpop.f32.mrf.mxu0
        %v627 = vadd.f32 %v562, %v626
        %628 = vmatmul.f32.gmra.mxu0 %v202
        %v629 = vpop.f32.mrf.mxu0
        %v630 = vadd.f32 %v565, %v629
        %631 = vmatmul.f32.gmra.mxu0 %v208
        %v632 = vpop.f32.mrf.mxu0
        %v633 = vadd.f32 %v568, %v632
        %634 = vmatmul.f32.gmra.mxu0 %v214
        %v635 = vpop.f32.mrf.mxu0
        %v636 = vadd.f32 %v571, %v635
        %637 = vmatmul.f32.gmra.mxu0 %v220
        %v638 = vpop.f32.mrf.mxu0
        %v639 = vadd.f32 %v574, %v638
        %640 = vmatmul.f32.gmra.mxu0 %v226
        %v641 = vpop.f32.mrf.mxu0
        %v642 = vadd.f32 %v577, %v641
        %643 = vmatmul.f32.gmra.mxu0 %v232
        %v644 = vpop.f32.mrf.mxu0
        %v645 = vadd.f32 %v580, %v644
        %646 = vmatmul.f32.gmra.mxu0 %v238
        %v647 = vpop.f32.mrf.mxu0
        %v648 = vadd.f32 %v583, %v647
        %649 = vmatmul.f32.gmra.mxu0 %v244
        %v650 = vpop.f32.mrf.mxu0
        %v651 = vadd.f32 %v586, %v650
        %652 = vmatmul.f32.gmra.mxu0 %v250
        %v653 = vpop.f32.mrf.mxu0
        %v654 = vadd.f32 %v589, %v653
        %655 = vmatmul.f32.gmra.mxu0 %v256
        %v656 = vpop.f32.mrf.mxu0
        %v657 = vadd.f32 %v592, %v656
        %658 = vmatmul.f32.gmra.mxu0 %v262
        %v659 = vpop.f32.mrf.mxu0
        %v660 = vadd.f32 %v595, %v659
        %661 = vmatmul.f32.gmra.mxu0 %v268
        %v662 = vpop.f32.mrf.mxu0
        %v663 = vadd.f32 %v598, %v662
        %664 = vdwg.mxu0
        %665 = vmatpush.msra.mxu0 %v350
        %666 = vmatpush.msra.mxu0 %v349
        %667 = vmatpush.msra.mxu0 %v348
        %668 = vmatpush.msra.mxu0 %v347
        %669 = vmatpush.msra.mxu0 %v346
        %670 = vmatpush.msra.mxu0 %v345
        %671 = vmatpush.msra.mxu0 %v344
        %672 = vmatpush.msra.mxu0 %v343
        %673 = vmatpush.msra.mxu0 %v342
        %674 = vmatpush.msra.mxu0 %v341
        %675 = vmatpush.msra.mxu0 %v340
        %676 = vmatpush.msra.mxu0 %v339
        %677 = vmatpush.msra.mxu0 %v338
        %678 = vmatpush.msra.mxu0 %v337
        %679 = vmatpush.msra.mxu0 %v336
        %680 = vmatpush.msra.mxu0 %v335
        %681 = vmatmul.f32.gmra.mxu0 %v179
        %v682 = vpop.f32.mrf.mxu0
        %v683 = vadd.f32 %v618, %v682
        %684 = vmatmul.f32.gmra.mxu0 %v185
        %v685 = vpop.f32.mrf.mxu0
        %v686 = vadd.f32 %v621, %v685
        %687 = vmatmul.f32.gmra.mxu0 %v191
        %v688 = vpop.f32.mrf.mxu0
        %v689 = vadd.f32 %v624, %v688
        %690 = vmatmul.f32.gmra.mxu0 %v197
        %v691 = vpop.f32.mrf.mxu0
        %v692 = vadd.f32 %v627, %v691
        %693 = vmatmul.f32.gmra.mxu0 %v203
        %v694 = vpop.f32.mrf.mxu0
        %v695 = vadd.f32 %v630, %v694
        %696 = vmatmul.f32.gmra.mxu0 %v209
        %v697 = vpop.f32.mrf.mxu0
        %v698 = vadd.f32 %v633, %v697
        %699 = vmatmul.f32.gmra.mxu0 %v215
        %v700 = vpop.f32.mrf.mxu0
        %v701 = vadd.f32 %v636, %v700
        %702 = vmatmul.f32.gmra.mxu0 %v221
        %v703 = vpop.f32.mrf.mxu0
        %v704 = vadd.f32 %v639, %v703
        %705 = vmatmul.f32.gmra.mxu0 %v227
        %v706 = vpop.f32.mrf.mxu0
        %v707 = vadd.f32 %v642, %v706
        %708 = vmatmul.f32.gmra.mxu0 %v233
        %v709 = vpop.f32.mrf.mxu0
        %v710 = vadd.f32 %v645, %v709
        %711 = vmatmul.f32.gmra.mxu0 %v239
        %v712 = vpop.f32.mrf.mxu0
        %v713 = vadd.f32 %v648, %v712
        %714 = vmatmul.f32.gmra.mxu0 %v245
        %v715 = vpop.f32.mrf.mxu0
        %v716 = vadd.f32 %v651, %v715
        %717 = vmatmul.f32.gmra.mxu0 %v251
        %v718 = vpop.f32.mrf.mxu0
        %v719 = vadd.f32 %v654, %v718
        %720 = vmatmul.f32.gmra.mxu0 %v257
        %v721 = vpop.f32.mrf.mxu0
        %v722 = vadd.f32 %v657, %v721
        %723 = vmatmul.f32.gmra.mxu0 %v263
        %v724 = vpop.f32.mrf.mxu0
        %v725 = vadd.f32 %v660, %v724
        %726 = vmatmul.f32.gmra.mxu0 %v269
        %v727 = vpop.f32.mrf.mxu0
        %v728 = vadd.f32 %v663, %v727
        %729 = vdwg.mxu0
        %730 = vmatpush.msra.mxu0 0.0
        %731 = vmatpush.msra.mxu0 0.0
        %732 = vmatpush.msra.mxu0 0.0
        %733 = vmatpush.msra.mxu0 0.0
        %734 = vmatpush.msra.mxu0 0.0
        %735 = vmatpush.msra.mxu0 0.0
        %736 = vmatpush.msra.mxu0 0.0
        %737 = vmatpush.msra.mxu0 0.0
        %738 = vmatpush.msra.mxu0 0.0
        %739 = vmatpush.msra.mxu0 0.0
        %740 = vmatpush.msra.mxu0 0.0
        %741 = vmatpush.msra.mxu0 0.0
        %742 = vmatpush.msra.mxu0 0.0
        %743 = vmatpush.msra.mxu0 0.0
        %744 = vmatpush.msra.mxu0 0.0
        %745 = vmatpush.msra.mxu0 %v351
        %746 = vmatmul.f32.gmra.mxu0 %v358
        %v747 = vpop.f32.mrf.mxu0
        %v748 = vadd.f32 %v683, %v747
        %749 = vmatmul.f32.gmra.mxu0 %v361
        %v750 = vpop.f32.mrf.mxu0
        %v751 = vadd.f32 %v686, %v750
        %752 = vmatmul.f32.gmra.mxu0 %v364
        %v753 = vpop.f32.mrf.mxu0
        %v754 = vadd.f32 %v689, %v753
        %755 = vmatmul.f32.gmra.mxu0 %v367
        %v756 = vpop.f32.mrf.mxu0
        %v757 = vadd.f32 %v692, %v756
        %758 = vmatmul.f32.gmra.mxu0 %v370
        %v759 = vpop.f32.mrf.mxu0
        %v760 = vadd.f32 %v695, %v759
        %761 = vmatmul.f32.gmra.mxu0 %v373
        %v762 = vpop.f32.mrf.mxu0
        %v763 = vadd.f32 %v698, %v762
        %764 = vmatmul.f32.gmra.mxu0 %v376
        %v765 = vpop.f32.mrf.mxu0
        %v766 = vadd.f32 %v701, %v765
        %767 = vmatmul.f32.gmra.mxu0 %v379
        %v768 = vpop.f32.mrf.mxu0
        %v769 = vadd.f32 %v704, %v768
        %770 = vmatmul.f32.gmra.mxu0 %v382
        %v771 = vpop.f32.mrf.mxu0
        %v772 = vadd.f32 %v707, %v771
        %773 = vmatmul.f32.gmra.mxu0 %v385
        %v774 = vpop.f32.mrf.mxu0
        %v775 = vadd.f32 %v710, %v774
        %776 = vmatmul.f32.gmra.mxu0 %v388
        %v777 = vpop.f32.mrf.mxu0
        %v778 = vadd.f32 %v713, %v777
        %779 = vmatmul.f32.gmra.mxu0 %v391
        %v780 = vpop.f32.mrf.mxu0
        %v781 = vadd.f32 %v716, %v780
        %782 = vmatmul.f32.gmra.mxu0 %v394
        %v783 = vpop.f32.mrf.mxu0
        %v784 = vadd.f32 %v719, %v783
        %785 = vmatmul.f32.gmra.mxu0 %v397
        %v786 = vpop.f32.mrf.mxu0
        %v787 = vadd.f32 %v722, %v786
        %788 = vmatmul.f32.gmra.mxu0 %v400
        %v789 = vpop.f32.mrf.mxu0
        %v790 = vadd.f32 %v725, %v789
        %791 = vmatmul.f32.gmra.mxu0 %v403
        %v792 = vpop.f32.mrf.mxu0
        %v793 = vadd.f32 %v728, %v792
        %794 = vdwg.mxu0
        %v795 = vmax.f32 %v748, 0.0
        %v796 = vmax.f32 %v751, 0.0
        %v797 = vmax.f32 %v754, 0.0
        %v798 = vmax.f32 %v757, 0.0
        %v799 = vmax.f32 %v760, 0.0
        %v800 = vmax.f32 %v763, 0.0
        %v801 = vmax.f32 %v766, 0.0
        %v802 = vmax.f32 %v769, 0.0
        %v803 = vmax.f32 %v772, 0.0
        %v804 = vmax.f32 %v775, 0.0
        %v805 = vmax.f32 %v778, 0.0
        %v806 = vmax.f32 %v781, 0.0
        %v807 = vmax.f32 %v784, 0.0
        %v808 = vmax.f32 %v787, 0.0
        %v809 = vmax.f32 %v790, 0.0
        %v810 = vmax.f32 %v793, 0.0
        %811 = vst [vmem:[%s166] sm:$0xff] %v795
        %812 = vst [vmem:[%s166 + $0x8] sm:$0xff] %v796
        %813 = vst [vmem:[%s166 + $0x10] sm:$0xff] %v797
        %814 = vst [vmem:[%s166 + $0x18] sm:$0xff] %v798
        %815 = vst [vmem:[%s166 + $0x20] sm:$0xff] %v799
        %816 = vst [vmem:[%s166 + $0x28] sm:$0xff] %v800
        %817 = vst [vmem:[%s166 + $0x30] sm:$0xff] %v801
        %818 = vst [vmem:[%s166 + $0x38] sm:$0xff] %v802
        %819 = vst [vmem:[%s166 + $0x40] sm:$0xff] %v803
        %820 = vst [vmem:[%s166 + $0x48] sm:$0xff] %v804
        %821 = vst [vmem:[%s166 + $0x50] sm:$0xff] %v805
        %822 = vst [vmem:[%s166 + $0x58] sm:$0xff] %v806
        %823 = vst [vmem:[%s166 + $0x60] sm:$0xff] %v807
        %824 = vst [vmem:[%s166 + $0x68] sm:$0xff] %v808
        %825 = vst [vmem:[%s166 + $0x70] sm:$0xff] %v809
        %826 = vst [vmem:[%s166 + $0x78] sm:$0xff] %v810
        %s827 = sand.u32 %s93, 1
        %s828 = scalar_lea.sflag [#allocation3], %s827
        %s829 = sand.u32 %s93, 1
        %s830 = smul.addr %s829, 128
        %s831 = scalar_lea.vmem [#allocation2], %s830
        // Predicated region
        $region33: #{tpu_custom_call.1} parent=31 // pred_check
          %p832 = pneg %p103
        $region34: #{tpu_custom_call.1} parent=31 // pred_check_branch
          %834 = sbr.rel (%p832) target = $region36
        $region35: #{tpu_custom_call.1} parent=31 // pred_region
          %s835 = smul.u32 16, %s17
          %837 = vsyncadd %s828, 0
          %s838 = smul.addr %s835, 8
          %s839 = scalar_lea.hbm %s3, %s838
          %s840 = sshll.u32 %s831, 4
          %s841 = int_to_ptr.vmem [resolvable:$true] %s840
          %s842 = sshll.u32 %s839, 4
          %s843 = int_to_ptr.hbm [resolvable:$true] %s842
          %848 = dma.vmem_to_hbm [thread:$0]  %s841, 2048, %s843, %s828, 128, 128, 8
        $region36: #{tpu_custom_call.1} parent=31 // pred_fallthru
          _
      $region32: #{tpu_custom_call.1} parent=5 // pred_fallthru
        _
      %p849 = scmp.le.s32.totalorder 2, %s12
      // Predicated region
      $region37: #{tpu_custom_call.1} parent=5 // pred_check
        %p850 = pneg %p849
      $region38: #{tpu_custom_call.1} parent=5 // pred_check_branch
        %852 = sbr.rel (%p850) target = $region40
      $region39: #{tpu_custom_call.1} parent=5 // pred_region
        %s853 = ssub.s32 %s12, 2
        // Predicated region
        $region41: #{tpu_custom_call.1} parent=39 // pred_check
          %p854 = pneg %p109
        $region42: #{tpu_custom_call.1} parent=39 // pred_check_branch
          %856 = sbr.rel (%p854) target = $region44
        $region43: #{tpu_custom_call.1} parent=39 // pred_region
          %s857 = sand.u32 %s94, 1
          %s858 = scalar_lea.sflag [#allocation3], %s857
          %s859 = sand.u32 %s94, 1
          %s860 = smul.addr %s859, 128
          %s861 = scalar_lea.vmem [#allocation2], %s860
          %863 = dma.done %s858, 2048
        $region44: #{tpu_custom_call.1} parent=39 // pred_fallthru
          _
      $region40: #{tpu_custom_call.1} parent=5 // pred_fallthru
        _
    $region6: #{tpu_custom_call.1} parent=1 // loop_footer
      %s16 = sadd.s32 1, %s12
    $region7: #{tpu_custom_call.1} parent=1 // loop_footer_branch
      %11 = sbr.rel target = $region3
    $region8: #{tpu_custom_call.1} parent=1 // loop_exit
      _
    %864 = vsyncpa [#allocation3], 1
    %s865 = scalar_lea.sflag [#allocation3], 1
    %866 = vsyncpa %s865, 1

</llo_original>
